<compile_context>
chip_gen: v6e
topology: v6e:2x2x1
jax: 0.10.0
libtpu: 0.0.40
codegen_flags: <defaults>
</compile_context>

<pallas_src>
import jax
import jax.numpy as jnp
from jax.experimental import pallas as pl
from jax.experimental.pallas import tpu as pltpu

IN_DIM = 2
HID_DIM = 2
OUT_DIM = 1

SUBLANES = 8          # feature axis padded to one sublane tile
TILE_B = 1024         # batch tile along lanes (multiple of 128)
N_PARAMS = 9          # 4 (w1) + 2 (b1) + 2 (w2) + 1 (b2)


def mlp_kernel(params_ref, x_ref, o_ref):
    """VPU/EUP-only fused forward for one (SUBLANES, TILE_B) batch tile.

    params_ref: f32[9] in SMEM = [w1_00, w1_01, w1_10, w1_11,
                                  b1_0, b1_1, w2_00, w2_01, b2_0]
    x_ref:      f32[SUBLANES, TILE_B] in VMEM; row 0 = feature 0, row 1 = feature 1.
    o_ref:      f32[1, TILE_B] in VMEM (lane-dense output row).
    """
    x0 = x_ref[0:1, :]                      # (1, TILE_B)
    x1 = x_ref[1:2, :]                      # (1, TILE_B)

    w1_00 = params_ref[0]
    w1_01 = params_ref[1]
    w1_10 = params_ref[2]
    w1_11 = params_ref[3]
    b1_0 = params_ref[4]
    b1_1 = params_ref[5]
    w2_00 = params_ref[6]
    w2_01 = params_ref[7]
    b2_0 = params_ref[8]

    # Layer 1: h_j = sigmoid(w1[j,0]*x0 + w1[j,1]*x1 + b1[j])   (VPU + EUP)
    h0 = jax.nn.sigmoid(w1_00 * x0 + w1_01 * x1 + b1_0)
    h1 = jax.nn.sigmoid(w1_10 * x0 + w1_11 * x1 + b1_1)
    # Layer 2: y = sigmoid(w2[0,0]*h0 + w2[0,1]*h1 + b2[0])
    o_ref[...] = jax.nn.sigmoid(w2_00 * h0 + w2_01 * h1 + b2_0)


def pack_params(w1, b1, w2, b2):
    """Pack PyTorch-convention params (weight is (out_features, in_features))
    into a flat f32[9] array, done once at init (hoisted out of the hot path)."""
    return jnp.concatenate(
        [w1.reshape(-1), b1.reshape(-1), w2.reshape(-1), b2.reshape(-1)]
    ).astype(jnp.float32)


@jax.jit
def mlp_forward(x, params):
    """x: (B, 2) float32; params: flat f32[9] from pack_params(). Returns (B, 1)."""
    B = x.shape[0]
    n_tiles = pl.cdiv(B, TILE_B)
    Bp = n_tiles * TILE_B

    # Batch-in-lanes layout: features on sublanes, batch on lanes.
    x_p = jnp.zeros((SUBLANES, Bp), jnp.float32).at[:IN_DIM, :B].set(x.T)

    cost = pl.CostEstimate(
        flops=12 * Bp,                        # 6 MACs per padded sample
        transcendentals=3 * Bp,               # 3 sigmoids per padded sample
        bytes_accessed=(SUBLANES * Bp + Bp) * 4 + N_PARAMS * 4,
    )

    out = pl.pallas_call(
        mlp_kernel,
        out_shape=jax.ShapeDtypeStruct((1, Bp), jnp.float32),
        grid=(n_tiles,),
        in_specs=[
            pl.BlockSpec(memory_space=pltpu.MemorySpace.SMEM),    # 9 scalars, no DMA tiles
            pl.BlockSpec((SUBLANES, TILE_B), lambda i: (0, i)),   # batch tile (lanes)
        ],
        out_specs=pl.BlockSpec((1, TILE_B), lambda i: (0, i)),    # lane-dense output row
        compiler_params=pltpu.CompilerParams(
            dimension_semantics=("parallel",),        # batch axis -> both TCs on v7x
            vmem_limit_bytes=4 * 1024 * 1024,         # tiny tiles; fits 64 MiB v7x easily
        ),
        cost_estimate=cost,
    )(params, x_p)

    return out[0, :B].reshape(B, OUT_DIM)             # (B, 1)


def init_params(key):
    """Deterministic init mimicking PyTorch Linear default (U[-1/sqrt(fan_in), +])."""
    k1, k2, k3, k4 = jax.random.split(key, 4)
    bound1 = 1.0 / jnp.sqrt(IN_DIM)
    bound2 = 1.0 / jnp.sqrt(HID_DIM)
    w1 = jax.random.uniform(k1, (HID_DIM, IN_DIM), jnp.float32, -bound1, bound1)
    b1 = jax.random.uniform(k2, (HID_DIM,), jnp.float32, -bound1, bound1)
    w2 = jax.random.uniform(k3, (OUT_DIM, HID_DIM), jnp.float32, -bound2, bound2)
    b2 = jax.random.uniform(k4, (OUT_DIM,), jnp.float32, -bound2, bound2)
    return w1, b1, w2, b2


def mlp_reference(x, w1, b1, w2, b2):
    h = jax.nn.sigmoid(x @ w1.T + b1)
    return jax.nn.sigmoid(h @ w2.T + b2)


if __name__ == "__main__":
    key = jax.random.PRNGKey(0)
    kx, kp = jax.random.split(key)

    # XOR-style inputs plus a few random rows (batch=6, features=2).
    xor_pts = jnp.array([[0., 0.], [0., 1.], [1., 0.], [1., 1.]], jnp.float32)
    extra = jax.random.normal(kx, (2, IN_DIM), jnp.float32)
    x = jnp.concatenate([xor_pts, extra], axis=0)     # (6, 2)

    w1, b1, w2, b2 = init_params(kp)
    params = pack_params(w1, b1, w2, b2)              # packed once, outside hot path

    out = mlp_forward(x, params)
    out = jax.block_until_ready(out)

    ref = mlp_reference(x, w1, b1, w2, b2)
    assert out.shape == (x.shape[0], OUT_DIM), out.shape
    assert jnp.allclose(out, ref, atol=1e-5, rtol=1e-5), (out, ref)

    print("KERNEL_OK")
</pallas_src>

<mosaic_0001>
module attributes {stable_mosaic.version = 11 : i64} {
  func.func @mlp_kernel(%arg0: i32, %arg1: memref<9xf32, #tpu.memory_space<smem>>, %arg2: memref<8x1024xf32, #tpu.memory_space<vmem>>, %arg3: memref<1x1024xf32, #tpu.memory_space<vmem>>) attributes {dimension_semantics = [#tpu.dimension_semantics<parallel>], iteration_bounds = array<i64: 1>, scalar_prefetch = 0 : i64, scratch_operands = 0 : i64, tpu.core_type = #tpu.core_type<tc>, window_params = [{transform_indices = @transform_0, window_bounds = array<i64: 9>}, {transform_indices = @transform_1, window_bounds = array<i64: 8, 1024>}, {transform_indices = @transform_2, window_bounds = array<i64: 1, 1024>}]} {
    %c0 = arith.constant 0 : index
    %c0_0 = arith.constant 0 : index
    %0 = vector.load %arg2[%c0, %c0_0] : memref<8x1024xf32, #tpu.memory_space<vmem>>, vector<1x1024xf32>
    %c1 = arith.constant 1 : index
    %c0_1 = arith.constant 0 : index
    %1 = vector.load %arg2[%c1, %c0_1] : memref<8x1024xf32, #tpu.memory_space<vmem>>, vector<1x1024xf32>
    %c0_2 = arith.constant 0 : index
    %2 = memref.load %arg1[%c0_2] : memref<9xf32, #tpu.memory_space<smem>>
    %c1_3 = arith.constant 1 : index
    %3 = memref.load %arg1[%c1_3] : memref<9xf32, #tpu.memory_space<smem>>
    %c2 = arith.constant 2 : index
    %4 = memref.load %arg1[%c2] : memref<9xf32, #tpu.memory_space<smem>>
    %c3 = arith.constant 3 : index
    %5 = memref.load %arg1[%c3] : memref<9xf32, #tpu.memory_space<smem>>
    %c4 = arith.constant 4 : index
    %6 = memref.load %arg1[%c4] : memref<9xf32, #tpu.memory_space<smem>>
    %c5 = arith.constant 5 : index
    %7 = memref.load %arg1[%c5] : memref<9xf32, #tpu.memory_space<smem>>
    %c6 = arith.constant 6 : index
    %8 = memref.load %arg1[%c6] : memref<9xf32, #tpu.memory_space<smem>>
    %c7 = arith.constant 7 : index
    %9 = memref.load %arg1[%c7] : memref<9xf32, #tpu.memory_space<smem>>
    %c8 = arith.constant 8 : index
    %10 = memref.load %arg1[%c8] : memref<9xf32, #tpu.memory_space<smem>>
    %11 = vector.broadcast %2 : f32 to vector<1x1024xf32>
    %12 = arith.mulf %11, %0 : vector<1x1024xf32>
    %13 = vector.broadcast %3 : f32 to vector<1x1024xf32>
    %14 = arith.mulf %13, %1 : vector<1x1024xf32>
    %15 = arith.addf %12, %14 : vector<1x1024xf32>
    %16 = vector.broadcast %6 : f32 to vector<1x1024xf32>
    %17 = arith.addf %15, %16 : vector<1x1024xf32>
    %18 = arith.negf %17 : vector<1x1024xf32>
    %19 = math.exp %18 : vector<1x1024xf32>
    %cst = arith.constant 1.000000e+00 : f32
    %20 = vector.broadcast %cst : f32 to vector<1x1024xf32>
    %21 = arith.addf %20, %19 : vector<1x1024xf32>
    %22 = arith.divf %20, %21 : vector<1x1024xf32>
    %23 = vector.broadcast %4 : f32 to vector<1x1024xf32>
    %24 = arith.mulf %23, %0 : vector<1x1024xf32>
    %25 = vector.broadcast %5 : f32 to vector<1x1024xf32>
    %26 = arith.mulf %25, %1 : vector<1x1024xf32>
    %27 = arith.addf %24, %26 : vector<1x1024xf32>
    %28 = vector.broadcast %7 : f32 to vector<1x1024xf32>
    %29 = arith.addf %27, %28 : vector<1x1024xf32>
    %30 = arith.negf %29 : vector<1x1024xf32>
    %31 = math.exp %30 : vector<1x1024xf32>
    %cst_4 = arith.constant 1.000000e+00 : f32
    %32 = vector.broadcast %cst_4 : f32 to vector<1x1024xf32>
    %33 = arith.addf %32, %31 : vector<1x1024xf32>
    %34 = arith.divf %32, %33 : vector<1x1024xf32>
    %35 = vector.broadcast %8 : f32 to vector<1x1024xf32>
    %36 = arith.mulf %35, %22 : vector<1x1024xf32>
    %37 = vector.broadcast %9 : f32 to vector<1x1024xf32>
    %38 = arith.mulf %37, %34 : vector<1x1024xf32>
    %39 = arith.addf %36, %38 : vector<1x1024xf32>
    %40 = vector.broadcast %10 : f32 to vector<1x1024xf32>
    %41 = arith.addf %39, %40 : vector<1x1024xf32>
    %42 = arith.negf %41 : vector<1x1024xf32>
    %43 = math.exp %42 : vector<1x1024xf32>
    %cst_5 = arith.constant 1.000000e+00 : f32
    %44 = vector.broadcast %cst_5 : f32 to vector<1x1024xf32>
    %45 = arith.addf %44, %43 : vector<1x1024xf32>
    %46 = arith.divf %44, %45 : vector<1x1024xf32>
    %c0_6 = arith.constant 0 : index
    %c0_7 = arith.constant 0 : index
    %47 = vector.load %arg3[%c0_6, %c0_7] : memref<1x1024xf32, #tpu.memory_space<vmem>>, vector<1x1024xf32>
    tpu.vector_store %arg3[%c0_6, %c0_7], %46 {strides = array<i32>} : memref<1x1024xf32, #tpu.memory_space<vmem>>, vector<1x1024xf32>,
    return
  }
  func.func @transform_0(%arg0: i32) -> i32 {
    %c0_i32 = arith.constant 0 : i32
    %c0_i32_0 = arith.constant 0 : i32
    return %c0_i32 : i32
  }
  func.func @transform_1(%arg0: i32) -> (i32, i32) {
    %c0_i32 = arith.constant 0 : i32
    %c0_i32_0 = arith.constant 0 : i32
    return %c0_i32, %arg0 : i32, i32
  }
  func.func @transform_2(%arg0: i32) -> (i32, i32) {
    %c0_i32 = arith.constant 0 : i32
    %c0_i32_0 = arith.constant 0 : i32
    return %c0_i32, %arg0 : i32, i32
  }
}

</mosaic_0001>

<llo_original>
// kernel: mlp_forward.1
$region0: #{mlp_forward.1}
  #allocation0 [shape = 'u32[]', space=smem, size = 0x4, offset = 0x4, fixed_abs, tag = 'smem constant byte address 0x4 - core index']
  #allocation1 [shape = 'u32[144,128]{1,0:T(1,128)}', space=vmem, size = 0x12000, scoped, tag = 'internal scratch']
  %s0 = inlined_call_operand.vmem [shape: f32[9], index: 0, kind: input, shape index: {}]
  %s1 = inlined_call_operand.vmem [shape: f32[8,1024], index: 1, kind: input, shape index: {}]
  %s2 = inlined_call_operand.vmem [shape: f32[1,1024], index: 2, kind: output, shape index: {}]
  %s3 = sld [smem:[#allocation0]]
  $region22: #{mlp_forward.1} parent=0
    _
  %s5 = ssub.s32 1, %s3
  %s6 = scalar_select 0, %s5, %s3
  $region1: #{mlp_forward.1} parent=0
    #allocation2 [shape = 'u8[512]{0}', space=smem, size = 0x200, scoped, tag = 'input window, operand 0, single buffered']
    #allocation3 [shape = 's32[1]{0}', space=sflag, size = 0x4, scoped, tag = 'scoped memory for mlp_forward.1']
    %7 = vsyncpa [#allocation3], 0
    // Predicated region
    $region2: #{mlp_forward.1} parent=1 // pred_check
      _
    $region3: #{mlp_forward.1} parent=1 // pred_check_branch
      %9 = sbr.rel (0) target = $region5
    $region4: #{mlp_forward.1} parent=1 // pred_region
      %s11 = ssub.s32 16, 16
      %12 = vsyncadd [#allocation3], %s11
      %s14 = sshll.u32 %s0, 4
      %s15 = int_to_ptr.vmem [resolvable:$true] %s14
      %17 = dma.vmem_to_smem %s15, 16, [#allocation2], [#allocation3]
    $region5: #{mlp_forward.1} parent=1 // pred_fallthru
      _
    // Predicated region
    $region6: #{mlp_forward.1} parent=1 // pred_check
      _
    $region7: #{mlp_forward.1} parent=1 // pred_check_branch
      %19 = sbr.rel (0) target = $region9
    $region8: #{mlp_forward.1} parent=1 // pred_region
      _
    $region9: #{mlp_forward.1} parent=1 // pred_fallthru
      _
    // Predicated region
    $region10: #{mlp_forward.1} parent=1 // pred_check
      _
    $region11: #{mlp_forward.1} parent=1 // pred_check_branch
      %21 = sbr.rel (0) target = $region13
    $region12: #{mlp_forward.1} parent=1 // pred_region
      %22 = dma.done [#allocation3], 16
    $region13: #{mlp_forward.1} parent=1 // pred_fallthru
      _
    %23 = sfence
    %v24 = vld [vmem:[%s1] ss:$8 sm:$0xf]
    %v25 = vld [vmem:[%s1] ss:$8 sm:$0xf0]
    %v26 = vor.u32 %v24, %v25
    %s27 = scalar_lea.vmem %s1, 1
    %v28 = vld [vmem:[%s27] ss:$8 sm:$0xf]
    %v29 = vld [vmem:[%s27] ss:$8 sm:$0xf0]
    %v30 = vor.u32 %v28, %v29
    %s31 = sld [smem:[#allocation2]]
    %s32 = sld [smem:[#allocation2 + $0x1]]
    %s33 = sld [smem:[#allocation2 + $0x2]]
    %s34 = sld [smem:[#allocation2 + $0x3]]
    %s35 = sld [smem:[#allocation2 + $0x4]]
    %s36 = sld [smem:[#allocation2 + $0x5]]
    %s37 = sld [smem:[#allocation2 + $0x6]]
    %s38 = sld [smem:[#allocation2 + $0x7]]
    %s39 = sld [smem:[#allocation2 + $0x8]]
    %v40 = vstv %s31
    %v41 = vmul.f32 %v40, %v26
    %v42 = vstv %s32
    %v43 = vmul.f32 %v42, %v30
    %v44 = vadd.f32 %v41, %v43
    %v45 = vstv %s35
    %v46 = vadd.f32 %v44, %v45
    %v47 = vxor.u32 %v46, 2147483648
    %v48 = vmul.f32 %v47, 1.442695
    %v49 = vpow.pop %v48
    %v50 = vadd.f32 %v49, 1.0
    %v51 = vrcp.pop %v50
    %v52 = vmul.f32 1.0, %v51
    %v53 = vstv %s33
    %v54 = vmul.f32 %v53, %v26
    %v55 = vstv %s34
    %v56 = vmul.f32 %v55, %v30
    %v57 = vadd.f32 %v54, %v56
    %v58 = vstv %s36
    %v59 = vadd.f32 %v57, %v58
    %v60 = vxor.u32 %v59, 2147483648
    %v61 = vmul.f32 %v60, 1.442695
    %v62 = vpow.pop %v61
    %v63 = vadd.f32 %v62, 1.0
    %v64 = vrcp.pop %v63
    %v65 = vmul.f32 1.0, %v64
    %v66 = vstv %s37
    %v67 = vmul.f32 %v66, %v52
    %v68 = vstv %s38
    %v69 = vmul.f32 %v68, %v65
    %v70 = vadd.f32 %v67, %v69
    %v71 = vstv %s39
    %v72 = vadd.f32 %v70, %v71
    %v73 = vxor.u32 %v72, 2147483648
    %v74 = vmul.f32 %v73, 1.442695
    %v75 = vpow.pop %v74
    %v76 = vadd.f32 %v75, 1.0
    %v77 = vrcp.pop %v76
    %v78 = vmul.f32 1.0, %v77
    %79 = vst [vmem:[%s2] sm:$0xff] %v78
    // Predicated region
    $region14: #{mlp_forward.1} parent=1 // pred_check
      _
    $region15: #{mlp_forward.1} parent=1 // pred_check_branch
      %81 = sbr.rel (0) target = $region17
    $region16: #{mlp_forward.1} parent=1 // pred_region
      _
    $region17: #{mlp_forward.1} parent=1 // pred_fallthru
      _
    // Predicated region
    $region18: #{mlp_forward.1} parent=1 // pred_check
      _
    $region19: #{mlp_forward.1} parent=1 // pred_check_branch
      %83 = sbr.rel (0) target = $region21
    $region20: #{mlp_forward.1} parent=1 // pred_region
      _
    $region21: #{mlp_forward.1} parent=1 // pred_fallthru
      _
    %84 = vsyncpa [#allocation3], 1

</llo_original>
